<compile_context>
chip_gen: v7x
topology: tpu7x:2x2x1
jax: 0.10.0
libtpu: 0.0.40
codegen_flags: <defaults>
</compile_context>

<pallas_src>
import functools

import numpy as np
import jax
import jax.numpy as jnp
from jax.experimental import pallas as pl
from jax.experimental.pallas import tpu as pltpu


def _round_up(x, m):
    return ((x + m - 1) // m) * m


def _cdiv(a, b):
    return -(-a // b)


@functools.lru_cache(maxsize=1)
def _vmem_capacity_bytes():
    try:
        info = pltpu.get_tpu_info()
        cap = int(getattr(info, "vmem_capacity_bytes", 0) or 0)
        if cap > 0:
            return cap
    except Exception:
        pass
    return 64 * 1024 * 1024  # conservative fallback = v7x per-TensorCore VMEM


def _vmem_limit_bytes(footprint):
    cap = _vmem_capacity_bytes()
    return int(min(max(2 * footprint + (4 << 20), 32 << 20), int(cap * 0.8)))


def _tight_tile(dim, cap, align):
    """Aligned tile <= ~cap covering `dim` with minimal padding.

    Returns (tile, padded_dim) with padded_dim % tile == 0.  Avoids the
    "cap then round whole dim up to the tile" blowup (e.g. 260 -> 512).
    """
    dim_a = _round_up(max(int(dim), 1), align)
    n0 = max(1, _cdiv(dim_a, cap))
    best_tile, best_pad = None, None
    for n in range(n0, n0 + 3):
        tile = _round_up(_cdiv(dim_a, n), align)
        padded = n * tile
        if best_pad is None or padded < best_pad:
            best_tile, best_pad = tile, padded
    return best_tile, best_pad


# ----------------------------------------------------------------------------
# Weight-norm prep kernels (run once per forward).
# ----------------------------------------------------------------------------
def _prep_single_kernel(wv_ref, mask_ref, g_ref, w_ref):
    """Single pass: whole in_features axis resident per 128..512-row tile."""
    wv = wv_ref[...] * mask_ref[...].astype(jnp.float32)                  # [rows, in]
    row_norm = jnp.sqrt(jnp.sum(wv * wv, axis=1, keepdims=True)) + 1e-8   # [rows, 1]
    if w_ref.dtype == jnp.float32:
        scale = jnp.exp(g_ref[...]) / row_norm          # exact path for f32 MXU operands
    else:
        # exp + approx reciprocal hit the otherwise-idle EUP slot; error is far
        # below the low-precision rounding of the store below.
        scale = jnp.exp(g_ref[...]) * pl.reciprocal(row_norm, approx=True)
    w_ref[...] = (wv * scale).astype(w_ref.dtype)


def _prep_norm_kernel(wv_ref, mask_ref, ss_ref):
    """Two-pass path, pass 1: K-tiled per-row sum of squares."""
    k = pl.program_id(1)

    @pl.when(k == 0)
    def _():
        ss_ref[...] = jnp.zeros_like(ss_ref)

    wv = wv_ref[...] * mask_ref[...].astype(jnp.float32)
    ss_ref[...] += jnp.sum(wv * wv, axis=1, keepdims=True)


def _prep_scale_kernel(wv_ref, mask_ref, g_ref, ss_ref, w_ref):
    """Two-pass path, pass 2: rescale each K tile by exp(g)/norm."""
    wv = wv_ref[...] * mask_ref[...].astype(jnp.float32)
    row_norm = jnp.sqrt(ss_ref[...]) + 1e-8
    if w_ref.dtype == jnp.float32:
        scale = jnp.exp(g_ref[...]) / row_norm
    else:
        scale = jnp.exp(g_ref[...]) * pl.reciprocal(row_norm, approx=True)
    w_ref[...] = (wv * scale).astype(w_ref.dtype)


def _prep_normalized_weight(weight_v, mask, weight_g, out_p, in_p, mxu_dtype,
                            *, single_pass_max_in=4096):
    out_f, in_f = weight_v.shape
    w_itemsize = jnp.dtype(mxu_dtype).itemsize

    wv = jnp.asarray(weight_v, jnp.float32)
    mk = jnp.asarray(mask, jnp.bfloat16)   # 0/1 exact in bf16, half the HBM read of f32
    g = jnp.asarray(weight_g, jnp.float32).reshape(out_f, 1)
    if (out_p, in_p) != (out_f, in_f):
        wv = jnp.pad(wv, ((0, out_p - out_f), (0, in_p - in_f)))
        mk = jnp.pad(mk, ((0, out_p - out_f), (0, in_p - in_f)))
        g = jnp.pad(g, ((0, out_p - out_f), (0, 0)))

    # ---- single-pass path (whole K per tile) --------------------------------
    rows_choices = [r for r in (512, 256, 128)
                    if out_p % r == 0
                    and 2 * r * in_p * (4 + 2 + w_itemsize) <= (24 << 20)]
    if in_p <= single_pass_max_in and rows_choices:
        rows = rows_choices[0]
        fp = 2 * rows * in_p * (4 + 2 + w_itemsize)
        return pl.pallas_call(
            _prep_single_kernel,
            out_shape=jax.ShapeDtypeStruct((out_p, in_p), mxu_dtype),
            grid_spec=pltpu.PrefetchScalarGridSpec(
                num_scalar_prefetch=0,
                grid=(out_p // rows,),
                in_specs=[
                    pl.BlockSpec((rows, in_p), lambda i: (i, 0)),   # weight_v (f32)
                    pl.BlockSpec((rows, in_p), lambda i: (i, 0)),   # mask (bf16)
                    pl.BlockSpec((rows, 1), lambda i: (i, 0)),      # weight_g
                ],
                out_specs=pl.BlockSpec((rows, in_p), lambda i: (i, 0)),
            ),
            compiler_params=pltpu.CompilerParams(
                dimension_semantics=("parallel",),
                vmem_limit_bytes=_vmem_limit_bytes(fp),
            ),
        )(wv, mk, g)

    # ---- K-tiled two-pass path (guards large in_features on v7x) ------------
    rows = 512 if out_p % 512 == 0 else (256 if out_p % 256 == 0 else 128)
    tk = max(t for t in (2048, 1024, 512, 256, 128) if in_p % t == 0)
    rgrid, kt = out_p // rows, in_p // tk

    fp_norm = 2 * rows * tk * (4 + 2) + 2 * rows * 4
    ss = pl.pallas_call(
        _prep_norm_kernel,
        out_shape=jax.ShapeDtypeStruct((out_p, 1), jnp.float32),
        grid_spec=pltpu.PrefetchScalarGridSpec(
            num_scalar_prefetch=0,
            grid=(rgrid, kt),
            in_specs=[
                pl.BlockSpec((rows, tk), lambda i, k: (i, k)),
                pl.BlockSpec((rows, tk), lambda i, k: (i, k)),
            ],
            out_specs=pl.BlockSpec((rows, 1), lambda i, k: (i, 0)),
        ),
        compiler_params=pltpu.CompilerParams(
            dimension_semantics=("parallel", "arbitrary"),
            vmem_limit_bytes=_vmem_limit_bytes(fp_norm),
        ),
    )(wv, mk)

    fp_scale = 2 * rows * tk * (4 + 2 + w_itemsize) + 4 * rows * 4
    return pl.pallas_call(
        _prep_scale_kernel,
        out_shape=jax.ShapeDtypeStruct((out_p, in_p), mxu_dtype),
        grid_spec=pltpu.PrefetchScalarGridSpec(
            num_scalar_prefetch=0,
            grid=(rgrid, kt),
            in_specs=[
                pl.BlockSpec((rows, tk), lambda i, k: (i, k)),   # weight_v
                pl.BlockSpec((rows, tk), lambda i, k: (i, k)),   # mask
                pl.BlockSpec((rows, 1), lambda i, k: (i, 0)),    # weight_g
                pl.BlockSpec((rows, 1), lambda i, k: (i, 0)),    # sum of squares
            ],
            out_specs=pl.BlockSpec((rows, tk), lambda i, k: (i, k)),
        ),
        compiler_params=pltpu.CompilerParams(
            dimension_semantics=("parallel", "parallel"),
            vmem_limit_bytes=_vmem_limit_bytes(fp_scale),
        ),
    )(wv, mk, g, ss)


# ----------------------------------------------------------------------------
# Matmul kernels:  out = x @ W.T + bias   (W is [out, in], contracted on in)
# ----------------------------------------------------------------------------
def _matmul_kernel_f32out(x_ref, w_ref, b_ref, o_ref):
    # o_ref is f32 and its block index is constant across k, so the tile stays
    # VMEM-resident: accumulate directly into it (no scratch, no final copy).
    k = pl.program_id(2)

    @pl.when(k == 0)
    def _():
        o_ref[...] = jnp.zeros_like(o_ref)

    o_ref[...] += jax.lax.dot_general(
        x_ref[...].astype(w_ref.dtype), w_ref[...],
        dimension_numbers=(((1,), (1,)), ((), ())),
        preferred_element_type=jnp.float32,
    )

    @pl.when(k == pl.num_programs(2) - 1)
    def _():
        o_ref[...] += b_ref[...]


def _matmul_kernel_castout(x_ref, w_ref, b_ref, o_ref, acc_ref):
    # Low-precision output: keep the f32 accumulator in scratch, cast at the end.
    k = pl.program_id(2)

    @pl.when(k == 0)
    def _():
        acc_ref[...] = jnp.zeros_like(acc_ref)

    acc_ref[...] += jax.lax.dot_general(
        x_ref[...].astype(w_ref.dtype), w_ref[...],
        dimension_numbers=(((1,), (1,)), ((), ())),
        preferred_element_type=jnp.float32,
    )

    @pl.when(k == pl.num_programs(2) - 1)
    def _():
        o_ref[...] = (acc_ref[...] + b_ref[...]).astype(o_ref.dtype)


def masked_linear_forward(x, weight_v, mask, weight_g, bias=None, *,
                          mxu_dtype=jnp.bfloat16, out_dtype=jnp.float32,
                          prep_single_pass_max_in=4096):
    """out = x @ (weight-normalized masked weight).T + bias.

    NOTE: the default mxu_dtype=bfloat16 quantizes the MXU operands relative to
    the f32 PyTorch module; pass mxu_dtype=jnp.float32 (and out_dtype=float32)
    for exact parity.
    """
    x = jnp.asarray(x)
    lead_shape = x.shape[:-1]
    in_f = x.shape[-1]
    out_f = weight_v.shape[0]
    x2 = x.reshape(-1, in_f)
    M = x2.shape[0]
    if bias is None:
        bias = jnp.zeros((out_f,), jnp.float32)

    x_itemsize = jnp.dtype(x2.dtype).itemsize
    w_itemsize = jnp.dtype(mxu_dtype).itemsize
    o_itemsize = jnp.dtype(out_dtype).itemsize

    # --- tile planning against the per-generation VMEM budget ----------------
    vmem_cap = _vmem_capacity_bytes()                      # 64 MiB v7x, 128 MiB v5e/v6e
    budget = min(int(vmem_cap * 0.7), 100 * 1024 * 1024)
    m_align = 16 if jnp.dtype(mxu_dtype) == jnp.dtype(jnp.bfloat16) else 8

    cap_m = 512
    cap_n = 2048 if budget >= (80 << 20) else 1024
    cap_k = 2048

    def footprint(tm, tn, tk):
        # double-buffered x, W, bias, out/accumulator (accumulation always f32)
        return 2 * (tm * tk * x_itemsize + tn * tk * w_itemsize + tn * 4
                    + tm * tn * max(o_itemsize, 4))

    while footprint(cap_m, cap_n, cap_k) > budget:
        if cap_k > 512:
            cap_k //= 2
        elif cap_n > 512:
            cap_n //= 2
        elif cap_m > 128:
            cap_m //= 2
        elif cap_k > 128:
            cap_k //= 2
        elif cap_n > 128:
            cap_n //= 2
        else:
            break

    tile_m, m_p = _tight_tile(M, cap_m, m_align)
    tile_n, out_p = _tight_tile(out_f, cap_n, 128)
    tile_k, in_p = _tight_tile(in_f, cap_k, 128)
    m_tiles, n_tiles, k_tiles = m_p // tile_m, out_p // tile_n, in_p // tile_k

    # Give v7x's second TensorCore work when the parallel grid would be (1, 1).
    if m_tiles == 1 and n_tiles == 1 and tile_n % 256 == 0:
        tile_n //= 2
        n_tiles = 2

    # --- one-shot masked weight-norm prep (hoisted out of the matmul loop) ---
    w_n = _prep_normalized_weight(weight_v, mask, weight_g, out_p, in_p,
                                  mxu_dtype,
                                  single_pass_max_in=prep_single_pass_max_in)
    # TODO(synk): cache w_n across forward calls when parameters are frozen
    # (inference), and fuse successive MaskedLinear layers of a MADE stack into
    # one pallas_call; optionally add an int8 (v5e/v6e) / fp8 (v7x) weight path
    # with the per-row scale folded into exp(g)/norm for weight-BW-bound decode.

    # x stays in its original dtype (the kernel casts each tile to the MXU
    # dtype), avoiding a separate full-HBM pad+cast pass.  Pad only if needed.
    if (m_p, in_p) != (M, in_f):
        x2 = jnp.pad(x2, ((0, m_p - M), (0, in_p - in_f)))
    b_p = bias.astype(jnp.float32).reshape(1, out_f)
    if out_p != out_f:
        b_p = jnp.pad(b_p, ((0, 0), (0, out_p - out_f)))

    grid = (m_tiles, n_tiles, k_tiles)

    cost = pl.CostEstimate(
        flops=2 * m_p * in_p * out_p,
        transcendentals=0,
        bytes_accessed=(m_p * in_p * x_itemsize * n_tiles       # x re-read per N tile
                        + out_p * in_p * w_itemsize * m_tiles   # W re-read per M tile
                        + out_p * 4
                        + m_p * out_p * o_itemsize),
    )

    if jnp.dtype(out_dtype) == jnp.dtype(jnp.float32):
        kernel, scratch = _matmul_kernel_f32out, []
    else:
        kernel = _matmul_kernel_castout
        scratch = [pltpu.VMEM((tile_m, tile_n), jnp.float32)]

    out_full = pl.pallas_call(
        kernel,
        out_shape=jax.ShapeDtypeStruct((m_p, out_p), out_dtype),
        grid_spec=pltpu.PrefetchScalarGridSpec(
            num_scalar_prefetch=0,
            grid=grid,
            in_specs=[
                pl.BlockSpec((tile_m, tile_k), lambda i, j, k: (i, k)),   # x
                pl.BlockSpec((tile_n, tile_k), lambda i, j, k: (j, k)),   # W [out, in]
                pl.BlockSpec((1, tile_n), lambda i, j, k: (0, j)),        # bias
            ],
            out_specs=pl.BlockSpec((tile_m, tile_n), lambda i, j, k: (i, j)),
            scratch_shapes=scratch,
        ),
        compiler_params=pltpu.CompilerParams(
            dimension_semantics=("parallel", "parallel", "arbitrary"),
            vmem_limit_bytes=_vmem_limit_bytes(footprint(tile_m, tile_n, tile_k)),
        ),
        cost_estimate=cost,
    )(x2, w_n, b_p)

    out = out_full[:M, :out_f]
    return out.reshape(lead_shape + (out_f,))


# ----------------------------------------------------------------------------
# Parameter / mask construction (mirrors MaskedLinear.__init__ / reset_parameters)
# ----------------------------------------------------------------------------
def build_mask(in_features, out_features, mask_type, total_units, max_units=None):
    layer_type, order = mask_type
    assert layer_type in {'input-hidden', 'hidden-hidden', 'hidden-output', 'input-output'}
    assert order in {'A', 'B'}
    if layer_type.startswith('input'):
        max_units = np.arange(in_features) + 1
    else:
        assert max_units is not None and len(max_units) == in_features
    if layer_type.endswith('output'):
        assert out_features > total_units
        mx = np.arange(out_features)
        mx[total_units:] = total_units
    else:
        units_per_units = float(total_units) / out_features
        mx = np.zeros(out_features, dtype=np.int32)
        for i in range(out_features):
            mx[i] = np.ceil((i + 1) * units_per_units)
    mask = np.zeros([out_features, in_features], dtype=np.float32)
    for i in range(out_features):
        for j in range(in_features):
            mask[i, j] = float(mx[i] >= max_units[j])
    if order == 'B':
        mask = np.copy(mask[::-1, ::-1])
    return mask


def init_params(key, in_features, out_features, mask):
    # nn.init.normal_(weight_v, mean=0, std=0.05); weight_v *= mask
    weight_v = 0.05 * jax.random.normal(key, (out_features, in_features), jnp.float32)
    weight_v = weight_v * mask
    # weight_g = log(row_norm + 1e-8)
    row_norm = jnp.sqrt(jnp.sum(weight_v * weight_v, axis=1, keepdims=True)) + 1e-8
    weight_g = jnp.log(row_norm)                          # [out, 1]
    bias = jnp.zeros((out_features,), jnp.float32)
    return weight_v, weight_g, bias


def _reference(x, weight_v, mask, weight_g, bias):
    wv = weight_v * mask
    nrm = jnp.sqrt(jnp.sum(wv * wv, axis=1, keepdims=True)) + 1e-8
    w = wv * (jnp.exp(weight_g) / nrm)
    return x @ w.T + bias


if __name__ == "__main__":
    key = jax.random.PRNGKey(0)

    # --- Config 1: input-hidden, order 'A', tiny MADE layer -------------------
    in_f, out_f, total_units, batch = 32, 48, 32, 8
    mask1 = jnp.asarray(build_mask(in_f, out_f, ('input-hidden', 'A'), total_units),
                        jnp.float32)
    k_w, k_x, key = jax.random.split(key, 3)
    wv1, wg1, b1 = init_params(k_w, in_f, out_f, mask1)
    x1 = jax.random.normal(k_x, (batch, in_f), jnp.float32)
    ref1 = _reference(x1, wv1, mask1, wg1, b1)

    # bf16 MXU operands, f32 accumulation + f32 output (default).
    out_bf16 = jax.block_until_ready(masked_linear_forward(x1, wv1, mask1, wg1, b1))
    assert out_bf16.shape == (batch, out_f)
    assert jnp.allclose(out_bf16, ref1, atol=1e-2, rtol=1e-2), "bf16 MXU path mismatch"

    # f32 MXU path: exact parity with the PyTorch module.
    out_f32 = jax.block_until_ready(
        masked_linear_forward(x1, wv1, mask1, wg1, b1, mxu_dtype=jnp.float32))
    assert jnp.allclose(out_f32, ref1, atol=1e-5, rtol=1e-5), "f32 MXU path mismatch"

    # bf16 output path (halved writeback; f32 scratch accumulator in-kernel).
    out_bf16o = jax.block_until_ready(
        masked_linear_forward(x1, wv1, mask1, wg1, b1, out_dtype=jnp.bfloat16))
    assert out_bf16o.dtype == jnp.bfloat16
    assert jnp.allclose(out_bf16o.astype(jnp.float32), ref1, atol=3e-2, rtol=3e-2), \
        "bf16 output path mismatch"

    # --- Config 2: order 'B', non-multiple dims, forced two-pass K-tiled prep --
    in_f2, out_f2, total2, batch2 = 300, 70, 300, 10
    mask2 = jnp.asarray(build_mask(in_f2, out_f2, ('input-hidden', 'B'), total2),
                        jnp.float32)
    k_w2, k_x2, key = jax.random.split(key, 3)
    wv2, wg2, b2 = init_params(k_w2, in_f2, out_f2, mask2)
    x2 = jax.random.normal(k_x2, (batch2, in_f2), jnp.float32)
    ref2 = _reference(x2, wv2, mask2, wg2, b2)

    out2 = jax.block_until_ready(
        masked_linear_forward(x2, wv2, mask2, wg2, b2, mxu_dtype=jnp.float32,
                              prep_single_pass_max_in=0))   # exercise two-pass prep
    assert out2.shape == (batch2, out_f2)
    assert jnp.allclose(out2, ref2, atol=1e-4, rtol=1e-4), "two-pass prep path mismatch"

    print("KERNEL_OK")
</pallas_src>

<mosaic_0001>
module attributes {stable_mosaic.version = 11 : i64} {
  func.func @_prep_single_kernel(%arg0: i32, %arg1: memref<128x128xf32, #tpu.memory_space<vmem>>, %arg2: memref<128x128xbf16, #tpu.memory_space<vmem>>, %arg3: memref<128x1xf32, #tpu.memory_space<vmem>>, %arg4: memref<128x128xbf16, #tpu.memory_space<vmem>>) attributes {dimension_semantics = [#tpu.dimension_semantics<parallel>], iteration_bounds = array<i64: 1>, scalar_prefetch = 0 : i64, scratch_operands = 0 : i64, tpu.core_type = #tpu.core_type<tc>, window_params = [{transform_indices = @transform_0, window_bounds = array<i64: 128, 128>}, {transform_indices = @transform_1, window_bounds = array<i64: 128, 128>}, {transform_indices = @transform_2, window_bounds = array<i64: 128, 1>}, {transform_indices = @transform_3, window_bounds = array<i64: 128, 128>}]} {
    %c0 = arith.constant 0 : index
    %c0_0 = arith.constant 0 : index
    %0 = vector.load %arg1[%c0, %c0_0] : memref<128x128xf32, #tpu.memory_space<vmem>>, vector<128x128xf32>
    %c0_1 = arith.constant 0 : index
    %c0_2 = arith.constant 0 : index
    %1 = vector.load %arg2[%c0_1, %c0_2] : memref<128x128xbf16, #tpu.memory_space<vmem>>, vector<128x128xbf16>
    %2 = arith.extf %1 : vector<128x128xbf16> to vector<128x128xf32>
    %3 = arith.mulf %0, %2 : vector<128x128xf32>
    %4 = arith.mulf %3, %3 : vector<128x128xf32>
    %cst = arith.constant dense<0.000000e+00> : vector<128xf32>
    %5 = vector.multi_reduction <add>, %4, %cst [1] : vector<128x128xf32> to vector<128xf32>
    %6 = vector.shape_cast %5 : vector<128xf32> to vector<128x1xf32>
    %7 = math.sqrt %6 : vector<128x1xf32>
    %cst_3 = arith.constant 9.99999993E-9 : f32
    %8 = vector.broadcast %cst_3 : f32 to vector<128x1xf32>
    %9 = arith.addf %7, %8 : vector<128x1xf32>
    %c0_4 = arith.constant 0 : index
    %c0_5 = arith.constant 0 : index
    %10 = vector.load %arg3[%c0_4, %c0_5] : memref<128x1xf32, #tpu.memory_space<vmem>>, vector<128x1xf32>
    %11 = math.exp %10 : vector<128x1xf32>
    %12 = tpu.reciprocal %9 {approx = true} : vector<128x1xf32> -> vector<128x1xf32>
    %13 = arith.mulf %11, %12 : vector<128x1xf32>
    %14 = vector.broadcast %13 : vector<128x1xf32> to vector<128x128xf32>
    %15 = arith.mulf %3, %14 : vector<128x128xf32>
    %16 = arith.truncf %15 : vector<128x128xf32> to vector<128x128xbf16>
    %c0_6 = arith.constant 0 : index
    %c0_7 = arith.constant 0 : index
    %17 = vector.load %arg4[%c0_6, %c0_7] : memref<128x128xbf16, #tpu.memory_space<vmem>>, vector<128x128xbf16>
    tpu.vector_store %arg4[%c0_6, %c0_7], %16 {strides = array<i32>} : memref<128x128xbf16, #tpu.memory_space<vmem>>, vector<128x128xbf16>,
    return
  }
  func.func @transform_0(%arg0: i32) -> (i32, i32) {
    %c0_i32 = arith.constant 0 : i32
    %c0_i32_0 = arith.constant 0 : i32
    return %arg0, %c0_i32 : i32, i32
  }
  func.func @transform_1(%arg0: i32) -> (i32, i32) {
    %c0_i32 = arith.constant 0 : i32
    %c0_i32_0 = arith.constant 0 : i32
    return %arg0, %c0_i32 : i32, i32
  }
  func.func @transform_2(%arg0: i32) -> (i32, i32) {
    %c0_i32 = arith.constant 0 : i32
    %c0_i32_0 = arith.constant 0 : i32
    return %arg0, %c0_i32 : i32, i32
  }
  func.func @transform_3(%arg0: i32) -> (i32, i32) {
    %c0_i32 = arith.constant 0 : i32
    %c0_i32_0 = arith.constant 0 : i32
    return %arg0, %c0_i32 : i32, i32
  }
}

</mosaic_0001>

<llo_original>
// kernel: tpu_custom_call.1
$region0: #{tpu_custom_call.1}
  #allocation0 [shape = 'u32[]', space=smem, size = 0x4, offset = 0x4, fixed_abs, tag = 'smem constant byte address 0x4 - core index']
  #allocation1 [shape = 'u32[144,128]{1,0:T(1,128)}', space=vmem, size = 0x12000, scoped, tag = 'internal scratch']
  %s0 = inlined_call_operand.vmem [shape: f32[128,128], index: 0, kind: input, shape index: {}]
  %s1 = inlined_call_operand.hbm [shape: bf16[128,128], index: 1, kind: input, shape index: {}]
  %s2 = inlined_call_operand.vmem [shape: f32[128,1], index: 2, kind: input, shape index: {}]
  %s3 = inlined_call_operand.hbm [shape: bf16[128,128], index: 3, kind: output, shape index: {}]
  %s4 = sld [smem:[#allocation0]]
  $region26: #{tpu_custom_call.1} parent=0
    _
  %s6 = ssub.s32 1, %s4
  %s7 = scalar_select 0, %s6, %s4
  $region1: #{tpu_custom_call.1} parent=0
    #allocation2 [shape = 'u8[32768]{0}', space=vmem, size = 0x8000, scoped, tag = 'input window, operand 1, single buffered']
    #allocation3 [shape = 's32[1]{0}', space=sflag, size = 0x4, scoped, tag = 'scoped memory for tpu_custom_call.1']
    #allocation4 [shape = 's32[1]{0}', space=sflag, size = 0x4, scoped, tag = 'scoped memory for tpu_custom_call.1']
    #allocation5 [shape = 'u8[32768]{0}', space=vmem, size = 0x8000, scoped, tag = 'output window, operand 0, single buffered']
    %8 = vsyncpa [#allocation3], 0
    %9 = vsyncpa [#allocation4], 0
    // Predicated region
    $region2: #{tpu_custom_call.1} parent=1 // pred_check
      _
    $region3: #{tpu_custom_call.1} parent=1 // pred_check_branch
      %11 = sbr.rel (0) target = $region5
    $region4: #{tpu_custom_call.1} parent=1 // pred_region
      _
    $region5: #{tpu_custom_call.1} parent=1 // pred_fallthru
      _
    // Predicated region
    $region6: #{tpu_custom_call.1} parent=1 // pred_check
      _
    $region7: #{tpu_custom_call.1} parent=1 // pred_check_branch
      %13 = sbr.rel (0) target = $region9
    $region8: #{tpu_custom_call.1} parent=1 // pred_region
      %s15 = ssub.s32 1024, 1024
      %16 = vsyncadd [#allocation3], %s15
      %s17 = sshll.u32 [#allocation2], 4
      %s18 = int_to_ptr.vmem [resolvable:$true] %s17
      %23 = dma.hbm_to_vmem [thread:$0]  %s1, 1024, %s18, [#allocation3], 64, 64, 4
    $region9: #{tpu_custom_call.1} parent=1 // pred_fallthru
      _
    // Predicated region
    $region10: #{tpu_custom_call.1} parent=1 // pred_check
      _
    $region11: #{tpu_custom_call.1} parent=1 // pred_check_branch
      %25 = sbr.rel (0) target = $region13
    $region12: #{tpu_custom_call.1} parent=1 // pred_region
      _
    $region13: #{tpu_custom_call.1} parent=1 // pred_fallthru
      _
    // Predicated region
    $region14: #{tpu_custom_call.1} parent=1 // pred_check
      _
    $region15: #{tpu_custom_call.1} parent=1 // pred_check_branch
      %27 = sbr.rel (0) target = $region17
    $region16: #{tpu_custom_call.1} parent=1 // pred_region
      %28 = dma.done [#allocation3], 1024
    $region17: #{tpu_custom_call.1} parent=1 // pred_fallthru
      _
    %v29 = vld [vmem:[%s0] sm:$0xff]
    %v30 = vld [vmem:[%s0 + $0x8] sm:$0xff]
    %v31 = vld [vmem:[%s0 + $0x10] sm:$0xff]
    %v32 = vld [vmem:[%s0 + $0x18] sm:$0xff]
    %v33 = vld [vmem:[%s0 + $0x20] sm:$0xff]
    %v34 = vld [vmem:[%s0 + $0x28] sm:$0xff]
    %v35 = vld [vmem:[%s0 + $0x30] sm:$0xff]
    %v36 = vld [vmem:[%s0 + $0x38] sm:$0xff]
    %v37 = vld [vmem:[%s0 + $0x40] sm:$0xff]
    %v38 = vld [vmem:[%s0 + $0x48] sm:$0xff]
    %v39 = vld [vmem:[%s0 + $0x50] sm:$0xff]
    %v40 = vld [vmem:[%s0 + $0x58] sm:$0xff]
    %v41 = vld [vmem:[%s0 + $0x60] sm:$0xff]
    %v42 = vld [vmem:[%s0 + $0x68] sm:$0xff]
    %v43 = vld [vmem:[%s0 + $0x70] sm:$0xff]
    %v44 = vld [vmem:[%s0 + $0x78] sm:$0xff]
    %v45 = vld [vmem:[#allocation2] sm:$0xf]
    %v46 = vld [vmem:[#allocation2 + $0x4] sm:$0xf]
    %v47 = vld [vmem:[#allocation2 + $0x8] sm:$0xf]
    %v48 = vld [vmem:[#allocation2 + $0xc] sm:$0xf]
    %v49 = vld [vmem:[#allocation2 + $0x10] sm:$0xf]
    %v50 = vld [vmem:[#allocation2 + $0x14] sm:$0xf]
    %v51 = vld [vmem:[#allocation2 + $0x18] sm:$0xf]
    %v52 = vld [vmem:[#allocation2 + $0x1c] sm:$0xf]
    %v53 = vld [vmem:[#allocation2 + $0x20] sm:$0xf]
    %v54 = vld [vmem:[#allocation2 + $0x24] sm:$0xf]
    %v55 = vld [vmem:[#allocation2 + $0x28] sm:$0xf]
    %v56 = vld [vmem:[#allocation2 + $0x2c] sm:$0xf]
    %v57 = vld [vmem:[#allocation2 + $0x30] sm:$0xf]
    %v58 = vld [vmem:[#allocation2 + $0x34] sm:$0xf]
    %v59 = vld [vmem:[#allocation2 + $0x38] sm:$0xf]
    %v60 = vld [vmem:[#allocation2 + $0x3c] sm:$0xf]
    %v61 = vunpack.c.l.bf16 %v45
    %v62 = vunpack.c.l.bf16 %v46
    %v63 = vunpack.c.l.bf16 %v47
    %v64 = vunpack.c.l.bf16 %v48
    %v65 = vunpack.c.l.bf16 %v49
    %v66 = vunpack.c.l.bf16 %v50
    %v67 = vunpack.c.l.bf16 %v51
    %v68 = vunpack.c.l.bf16 %v52
    %v69 = vunpack.c.l.bf16 %v53
    %v70 = vunpack.c.l.bf16 %v54
    %v71 = vunpack.c.l.bf16 %v55
    %v72 = vunpack.c.l.bf16 %v56
    %v73 = vunpack.c.l.bf16 %v57
    %v74 = vunpack.c.l.bf16 %v58
    %v75 = vunpack.c.l.bf16 %v59
    %v76 = vunpack.c.l.bf16 %v60
    %v77 = vmul.f32 %v29, %v61
    %v78 = vmul.f32 %v30, %v62
    %v79 = vmul.f32 %v31, %v63
    %v80 = vmul.f32 %v32, %v64
    %v81 = vmul.f32 %v33, %v65
    %v82 = vmul.f32 %v34, %v66
    %v83 = vmul.f32 %v35, %v67
    %v84 = vmul.f32 %v36, %v68
    %v85 = vmul.f32 %v37, %v69
    %v86 = vmul.f32 %v38, %v70
    %v87 = vmul.f32 %v39, %v71
    %v88 = vmul.f32 %v40, %v72
    %v89 = vmul.f32 %v41, %v73
    %v90 = vmul.f32 %v42, %v74
    %v91 = vmul.f32 %v43, %v75
    %v92 = vmul.f32 %v44, %v76
    %v93 = vmul.f32 %v77, %v77
    %v94 = vmul.f32 %v78, %v78
    %v95 = vmul.f32 %v79, %v79
    %v96 = vmul.f32 %v80, %v80
    %v97 = vmul.f32 %v81, %v81
    %v98 = vmul.f32 %v82, %v82
    %v99 = vmul.f32 %v83, %v83
    %v100 = vmul.f32 %v84, %v84
    %v101 = vmul.f32 %v85, %v85
    %v102 = vmul.f32 %v86, %v86
    %v103 = vmul.f32 %v87, %v87
    %v104 = vmul.f32 %v88, %v88
    %v105 = vmul.f32 %v89, %v89
    %v106 = vmul.f32 %v90, %v90
    %v107 = vmul.f32 %v91, %v91
    %v108 = vmul.f32 %v92, %v92
    %109 = vadd.xlane.f32.xlu0 %v93
    %v110 = vpop.xlane.xlu0 %109
    %111 = vadd.xlane.f32.xlu0 %v94
    %v112 = vpop.xlane.xlu0 %111
    %113 = vadd.xlane.f32.xlu0 %v95
    %v114 = vpop.xlane.xlu0 %113
    %115 = vadd.xlane.f32.xlu0 %v96
    %v116 = vpop.xlane.xlu0 %115
    %117 = vadd.xlane.f32.xlu0 %v97
    %v118 = vpop.xlane.xlu0 %117
    %119 = vadd.xlane.f32.xlu0 %v98
    %v120 = vpop.xlane.xlu0 %119
    %121 = vadd.xlane.f32.xlu0 %v99
    %v122 = vpop.xlane.xlu0 %121
    %123 = vadd.xlane.f32.xlu0 %v100
    %v124 = vpop.xlane.xlu0 %123
    %125 = vadd.xlane.f32.xlu0 %v101
    %v126 = vpop.xlane.xlu0 %125
    %127 = vadd.xlane.f32.xlu0 %v102
    %v128 = vpop.xlane.xlu0 %127
    %129 = vadd.xlane.f32.xlu0 %v103
    %v130 = vpop.xlane.xlu0 %129
    %131 = vadd.xlane.f32.xlu0 %v104
    %v132 = vpop.xlane.xlu0 %131
    %133 = vadd.xlane.f32.xlu0 %v105
    %v134 = vpop.xlane.xlu0 %133
    %135 = vadd.xlane.f32.xlu0 %v106
    %v136 = vpop.xlane.xlu0 %135
    %137 = vadd.xlane.f32.xlu0 %v107
    %v138 = vpop.xlane.xlu0 %137
    %139 = vadd.xlane.f32.xlu0 %v108
    %v140 = vpop.xlane.xlu0 %139
    %v141 = vrsqrt.pop %v110
    %v142 = vmul.f32 %v110, %v141
    %vm143 = vcmp.eq.f32.partialorder %v110, inf
    %v144 = vsel %vm143, %v110, %v142
    %vm145 = vcmp.eq.f32.partialorder %v110, 0.0
    %v146 = vand.u32 %v110, 2147483648
    %v147 = vsel %vm145, %v146, %v144
    %v148 = vrsqrt.pop %v112
    %v149 = vmul.f32 %v112, %v148
    %vm150 = vcmp.eq.f32.partialorder %v112, inf
    %v151 = vsel %vm150, %v112, %v149
    %vm152 = vcmp.eq.f32.partialorder %v112, 0.0
    %v153 = vand.u32 %v112, 2147483648
    %v154 = vsel %vm152, %v153, %v151
    %v155 = vrsqrt.pop %v114
    %v156 = vmul.f32 %v114, %v155
    %vm157 = vcmp.eq.f32.partialorder %v114, inf
    %v158 = vsel %vm157, %v114, %v156
    %vm159 = vcmp.eq.f32.partialorder %v114, 0.0
    %v160 = vand.u32 %v114, 2147483648
    %v161 = vsel %vm159, %v160, %v158
    %v162 = vrsqrt.pop %v116
    %v163 = vmul.f32 %v116, %v162
    %vm164 = vcmp.eq.f32.partialorder %v116, inf
    %v165 = vsel %vm164, %v116, %v163
    %vm166 = vcmp.eq.f32.partialorder %v116, 0.0
    %v167 = vand.u32 %v116, 2147483648
    %v168 = vsel %vm166, %v167, %v165
    %v169 = vrsqrt.pop %v118
    %v170 = vmul.f32 %v118, %v169
    %vm171 = vcmp.eq.f32.partialorder %v118, inf
    %v172 = vsel %vm171, %v118, %v170
    %vm173 = vcmp.eq.f32.partialorder %v118, 0.0
    %v174 = vand.u32 %v118, 2147483648
    %v175 = vsel %vm173, %v174, %v172
    %v176 = vrsqrt.pop %v120
    %v177 = vmul.f32 %v120, %v176
    %vm178 = vcmp.eq.f32.partialorder %v120, inf
    %v179 = vsel %vm178, %v120, %v177
    %vm180 = vcmp.eq.f32.partialorder %v120, 0.0
    %v181 = vand.u32 %v120, 2147483648
    %v182 = vsel %vm180, %v181, %v179
    %v183 = vrsqrt.pop %v122
    %v184 = vmul.f32 %v122, %v183
    %vm185 = vcmp.eq.f32.partialorder %v122, inf
    %v186 = vsel %vm185, %v122, %v184
    %vm187 = vcmp.eq.f32.partialorder %v122, 0.0
    %v188 = vand.u32 %v122, 2147483648
    %v189 = vsel %vm187, %v188, %v186
    %v190 = vrsqrt.pop %v124
    %v191 = vmul.f32 %v124, %v190
    %vm192 = vcmp.eq.f32.partialorder %v124, inf
    %v193 = vsel %vm192, %v124, %v191
    %vm194 = vcmp.eq.f32.partialorder %v124, 0.0
    %v195 = vand.u32 %v124, 2147483648
    %v196 = vsel %vm194, %v195, %v193
    %v197 = vrsqrt.pop %v126
    %v198 = vmul.f32 %v126, %v197
    %vm199 = vcmp.eq.f32.partialorder %v126, inf
    %v200 = vsel %vm199, %v126, %v198
    %vm201 = vcmp.eq.f32.partialorder %v126, 0.0
    %v202 = vand.u32 %v126, 2147483648
    %v203 = vsel %vm201, %v202, %v200
    %v204 = vrsqrt.pop %v128
    %v205 = vmul.f32 %v128, %v204
    %vm206 = vcmp.eq.f32.partialorder %v128, inf
    %v207 = vsel %vm206, %v128, %v205
    %vm208 = vcmp.eq.f32.partialorder %v128, 0.0
    %v209 = vand.u32 %v128, 2147483648
    %v210 = vsel %vm208, %v209, %v207
    %v211 = vrsqrt.pop %v130
    %v212 = vmul.f32 %v130, %v211
    %vm213 = vcmp.eq.f32.partialorder %v130, inf
    %v214 = vsel %vm213, %v130, %v212
    %vm215 = vcmp.eq.f32.partialorder %v130, 0.0
    %v216 = vand.u32 %v130, 2147483648
    %v217 = vsel %vm215, %v216, %v214
    %v218 = vrsqrt.pop %v132
    %v219 = vmul.f32 %v132, %v218
    %vm220 = vcmp.eq.f32.partialorder %v132, inf
    %v221 = vsel %vm220, %v132, %v219
    %vm222 = vcmp.eq.f32.partialorder %v132, 0.0
    %v223 = vand.u32 %v132, 2147483648
    %v224 = vsel %vm222, %v223, %v221
    %v225 = vrsqrt.pop %v134
    %v226 = vmul.f32 %v134, %v225
    %vm227 = vcmp.eq.f32.partialorder %v134, inf
    %v228 = vsel %vm227, %v134, %v226
    %vm229 = vcmp.eq.f32.partialorder %v134, 0.0
    %v230 = vand.u32 %v134, 2147483648
    %v231 = vsel %vm229, %v230, %v228
    %v232 = vrsqrt.pop %v136
    %v233 = vmul.f32 %v136, %v232
    %vm234 = vcmp.eq.f32.partialorder %v136, inf
    %v235 = vsel %vm234, %v136, %v233
    %vm236 = vcmp.eq.f32.partialorder %v136, 0.0
    %v237 = vand.u32 %v136, 2147483648
    %v238 = vsel %vm236, %v237, %v235
    %v239 = vrsqrt.pop %v138
    %v240 = vmul.f32 %v138, %v239
    %vm241 = vcmp.eq.f32.partialorder %v138, inf
    %v242 = vsel %vm241, %v138, %v240
    %vm243 = vcmp.eq.f32.partialorder %v138, 0.0
    %v244 = vand.u32 %v138, 2147483648
    %v245 = vsel %vm243, %v244, %v242
    %v246 = vrsqrt.pop %v140
    %v247 = vmul.f32 %v140, %v246
    %vm248 = vcmp.eq.f32.partialorder %v140, inf
    %v249 = vsel %vm248, %v140, %v247
    %vm250 = vcmp.eq.f32.partialorder %v140, 0.0
    %v251 = vand.u32 %v140, 2147483648
    %v252 = vsel %vm250, %v251, %v249
    %v253 = vadd.f32 %v147, 1e-08
    %v254 = vadd.f32 %v154, 1e-08
    %v255 = vadd.f32 %v161, 1e-08
    %v256 = vadd.f32 %v168, 1e-08
    %v257 = vadd.f32 %v175, 1e-08
    %v258 = vadd.f32 %v182, 1e-08
    %v259 = vadd.f32 %v189, 1e-08
    %v260 = vadd.f32 %v196, 1e-08
    %v261 = vadd.f32 %v203, 1e-08
    %v262 = vadd.f32 %v210, 1e-08
    %v263 = vadd.f32 %v217, 1e-08
    %v264 = vadd.f32 %v224, 1e-08
    %v265 = vadd.f32 %v231, 1e-08
    %v266 = vadd.f32 %v238, 1e-08
    %v267 = vadd.f32 %v245, 1e-08
    %v268 = vadd.f32 %v252, 1e-08
    %v269 = vld [vmem:[%s2] sm:$0xff]
    %v270 = vld [vmem:[%s2 + $0x8] sm:$0xff]
    %v271 = vld [vmem:[%s2 + $0x10] sm:$0xff]
    %v272 = vld [vmem:[%s2 + $0x18] sm:$0xff]
    %v273 = vld [vmem:[%s2 + $0x20] sm:$0xff]
    %v274 = vld [vmem:[%s2 + $0x28] sm:$0xff]
    %v275 = vld [vmem:[%s2 + $0x30] sm:$0xff]
    %v276 = vld [vmem:[%s2 + $0x38] sm:$0xff]
    %v277 = vld [vmem:[%s2 + $0x40] sm:$0xff]
    %v278 = vld [vmem:[%s2 + $0x48] sm:$0xff]
    %v279 = vld [vmem:[%s2 + $0x50] sm:$0xff]
    %v280 = vld [vmem:[%s2 + $0x58] sm:$0xff]
    %v281 = vld [vmem:[%s2 + $0x60] sm:$0xff]
    %v282 = vld [vmem:[%s2 + $0x68] sm:$0xff]
    %v283 = vld [vmem:[%s2 + $0x70] sm:$0xff]
    %v284 = vld [vmem:[%s2 + $0x78] sm:$0xff]
    %v285 = vmul.f32 %v269, 1.442695
    %v286 = vpow.pop %v285
    %v287 = vmul.f32 %v270, 1.442695
    %v288 = vpow.pop %v287
    %v289 = vmul.f32 %v271, 1.442695
    %v290 = vpow.pop %v289
    %v291 = vmul.f32 %v272, 1.442695
    %v292 = vpow.pop %v291
    %v293 = vmul.f32 %v273, 1.442695
    %v294 = vpow.pop %v293
    %v295 = vmul.f32 %v274, 1.442695
    %v296 = vpow.pop %v295
    %v297 = vmul.f32 %v275, 1.442695
    %v298 = vpow.pop %v297
    %v299 = vmul.f32 %v276, 1.442695
    %v300 = vpow.pop %v299
    %v301 = vmul.f32 %v277, 1.442695
    %v302 = vpow.pop %v301
    %v303 = vmul.f32 %v278, 1.442695
    %v304 = vpow.pop %v303
    %v305 = vmul.f32 %v279, 1.442695
    %v306 = vpow.pop %v305
    %v307 = vmul.f32 %v280, 1.442695
    %v308 = vpow.pop %v307
    %v309 = vmul.f32 %v281, 1.442695
    %v310 = vpow.pop %v309
    %v311 = vmul.f32 %v282, 1.442695
    %v312 = vpow.pop %v311
    %v313 = vmul.f32 %v283, 1.442695
    %v314 = vpow.pop %v313
    %v315 = vmul.f32 %v284, 1.442695
    %v316 = vpow.pop %v315
    %v317 = vrcp.pop %v253
    %v318 = vrcp.pop %v254
    %v319 = vrcp.pop %v255
    %v320 = vrcp.pop %v256
    %v321 = vrcp.pop %v257
    %v322 = vrcp.pop %v258
    %v323 = vrcp.pop %v259
    %v324 = vrcp.pop %v260
    %v325 = vrcp.pop %v261
    %v326 = vrcp.pop %v262
    %v327 = vrcp.pop %v263
    %v328 = vrcp.pop %v264
    %v329 = vrcp.pop %v265
    %v330 = vrcp.pop %v266
    %v331 = vrcp.pop %v267
    %v332 = vrcp.pop %v268
    %v333 = vmul.f32 %v286, %v317
    %v334 = vmul.f32 %v288, %v318
    %v335 = vmul.f32 %v290, %v319
    %v336 = vmul.f32 %v292, %v320
    %v337 = vmul.f32 %v294, %v321
    %v338 = vmul.f32 %v296, %v322
    %v339 = vmul.f32 %v298, %v323
    %v340 = vmul.f32 %v300, %v324
    %v341 = vmul.f32 %v302, %v325
    %v342 = vmul.f32 %v304, %v326
    %v343 = vmul.f32 %v306, %v327
    %v344 = vmul.f32 %v308, %v328
    %v345 = vmul.f32 %v310, %v329
    %v346 = vmul.f32 %v312, %v330
    %v347 = vmul.f32 %v314, %v331
    %v348 = vmul.f32 %v316, %v332
    %350 = vset.pattern.permute.xlu0 0
    %351 = vperm.xlu0 %350, %v333
    %v352 = vpop.permute.xlu0 %351
    %355 = vset.pattern.permute.xlu0 0
    %356 = vperm.xlu0 %355, %v334
    %v357 = vpop.permute.xlu0 %356
    %360 = vset.pattern.permute.xlu0 0
    %361 = vperm.xlu0 %360, %v335
    %v362 = vpop.permute.xlu0 %361
    %365 = vset.pattern.permute.xlu0 0
    %366 = vperm.xlu0 %365, %v336
    %v367 = vpop.permute.xlu0 %366
    %370 = vset.pattern.permute.xlu0 0
    %371 = vperm.xlu0 %370, %v337
    %v372 = vpop.permute.xlu0 %371
    %375 = vset.pattern.permute.xlu0 0
    %376 = vperm.xlu0 %375, %v338
    %v377 = vpop.permute.xlu0 %376
    %380 = vset.pattern.permute.xlu0 0
    %381 = vperm.xlu0 %380, %v339
    %v382 = vpop.permute.xlu0 %381
    %385 = vset.pattern.permute.xlu0 0
    %386 = vperm.xlu0 %385, %v340
    %v387 = vpop.permute.xlu0 %386
    %390 = vset.pattern.permute.xlu0 0
    %391 = vperm.xlu0 %390, %v341
    %v392 = vpop.permute.xlu0 %391
    %395 = vset.pattern.permute.xlu0 0
    %396 = vperm.xlu0 %395, %v342
    %v397 = vpop.permute.xlu0 %396
    %400 = vset.pattern.permute.xlu0 0
    %401 = vperm.xlu0 %400, %v343
    %v402 = vpop.permute.xlu0 %401
    %405 = vset.pattern.permute.xlu0 0
    %406 = vperm.xlu0 %405, %v344
    %v407 = vpop.permute.xlu0 %406
    %410 = vset.pattern.permute.xlu0 0
    %411 = vperm.xlu0 %410, %v345
    %v412 = vpop.permute.xlu0 %411
    %415 = vset.pattern.permute.xlu0 0
    %416 = vperm.xlu0 %415, %v346
    %v417 = vpop.permute.xlu0 %416
    %420 = vset.pattern.permute.xlu0 0
    %421 = vperm.xlu0 %420, %v347
    %v422 = vpop.permute.xlu0 %421
    %425 = vset.pattern.permute.xlu0 0
    %426 = vperm.xlu0 %425, %v348
    %v427 = vpop.permute.xlu0 %426
    %v429 = vmul.f32 %v77, %v352
    %v430 = vmul.f32 %v78, %v357
    %v431 = vmul.f32 %v79, %v362
    %v432 = vmul.f32 %v80, %v367
    %v433 = vmul.f32 %v81, %v372
    %v434 = vmul.f32 %v82, %v377
    %v435 = vmul.f32 %v83, %v382
    %v436 = vmul.f32 %v84, %v387
    %v437 = vmul.f32 %v85, %v392
    %v438 = vmul.f32 %v86, %v397
    %v439 = vmul.f32 %v87, %v402
    %v440 = vmul.f32 %v88, %v407
    %v441 = vmul.f32 %v89, %v412
    %v442 = vmul.f32 %v90, %v417
    %v443 = vmul.f32 %v91, %v422
    %v444 = vmul.f32 %v92, %v427
    %v445 = vpack.c.bf16 %v430, %v429
    %v446 = vpack.c.bf16 %v432, %v431
    %v447 = vpack.c.bf16 %v434, %v433
    %v448 = vpack.c.bf16 %v436, %v435
    %v449 = vpack.c.bf16 %v438, %v437
    %v450 = vpack.c.bf16 %v440, %v439
    %v451 = vpack.c.bf16 %v442, %v441
    %v452 = vpack.c.bf16 %v444, %v443
    %v461 = vunpack.c.l.b16 %v445
    %v462 = vunpack.c.h.b16 %v445
    %v463 = vunpack.c.l.b16 %v446
    %v464 = vunpack.c.h.b16 %v446
    %v465 = vunpack.c.l.b16 %v447
    %v466 = vunpack.c.h.b16 %v447
    %v467 = vunpack.c.l.b16 %v448
    %v468 = vunpack.c.h.b16 %v448
    %v469 = vunpack.c.l.b16 %v449
    %v470 = vunpack.c.h.b16 %v449
    %v471 = vunpack.c.l.b16 %v450
    %v472 = vunpack.c.h.b16 %v450
    %v473 = vunpack.c.l.b16 %v451
    %v474 = vunpack.c.h.b16 %v451
    %v475 = vunpack.c.l.b16 %v452
    %v476 = vunpack.c.h.b16 %v452
    %v477 = vpack.c.b16 %v461, %v461
    %v478 = vpack.c.b16 %v462, %v462
    %v479 = vpack.c.b16 %v463, %v463
    %v480 = vpack.c.b16 %v464, %v464
    %v481 = vpack.c.b16 %v465, %v465
    %v482 = vpack.c.b16 %v466, %v466
    %v483 = vpack.c.b16 %v467, %v467
    %v484 = vpack.c.b16 %v468, %v468
    %v485 = vpack.c.b16 %v469, %v469
    %v486 = vpack.c.b16 %v470, %v470
    %v487 = vpack.c.b16 %v471, %v471
    %v488 = vpack.c.b16 %v472, %v472
    %v489 = vpack.c.b16 %v473, %v473
    %v490 = vpack.c.b16 %v474, %v474
    %v491 = vpack.c.b16 %v475, %v475
    %v492 = vpack.c.b16 %v476, %v476
    %509 = vst [vmem:[#allocation5] sm:$0xf] %v477
    %510 = vst [vmem:[#allocation5 + $0x4] sm:$0xf] %v478
    %511 = vst [vmem:[#allocation5 + $0x8] sm:$0xf] %v479
    %512 = vst [vmem:[#allocation5 + $0xc] sm:$0xf] %v480
    %513 = vst [vmem:[#allocation5 + $0x10] sm:$0xf] %v481
    %514 = vst [vmem:[#allocation5 + $0x14] sm:$0xf] %v482
    %515 = vst [vmem:[#allocation5 + $0x18] sm:$0xf] %v483
    %516 = vst [vmem:[#allocation5 + $0x1c] sm:$0xf] %v484
    %517 = vst [vmem:[#allocation5 + $0x20] sm:$0xf] %v485
    %518 = vst [vmem:[#allocation5 + $0x24] sm:$0xf] %v486
    %519 = vst [vmem:[#allocation5 + $0x28] sm:$0xf] %v487
    %520 = vst [vmem:[#allocation5 + $0x2c] sm:$0xf] %v488
    %521 = vst [vmem:[#allocation5 + $0x30] sm:$0xf] %v489
    %522 = vst [vmem:[#allocation5 + $0x34] sm:$0xf] %v490
    %523 = vst [vmem:[#allocation5 + $0x38] sm:$0xf] %v491
    %524 = vst [vmem:[#allocation5 + $0x3c] sm:$0xf] %v492
    // Predicated region
    $region18: #{tpu_custom_call.1} parent=1 // pred_check
      _
    $region19: #{tpu_custom_call.1} parent=1 // pred_check_branch
      %526 = sbr.rel (0) target = $region21
    $region20: #{tpu_custom_call.1} parent=1 // pred_region
      %s528 = ssub.s32 1024, 1024
      %529 = vsyncadd [#allocation4], %s528
      %s530 = sshll.u32 [#allocation5], 4
      %s531 = int_to_ptr.vmem [resolvable:$true] %s530
      %536 = dma.vmem_to_hbm [thread:$0]  %s531, 1024, %s3, [#allocation4], 64, 64, 4
    $region21: #{tpu_custom_call.1} parent=1 // pred_fallthru
      _
    // Predicated region
    $region22: #{tpu_custom_call.1} parent=1 // pred_check
      _
    $region23: #{tpu_custom_call.1} parent=1 // pred_check_branch
      %538 = sbr.rel (0) target = $region25
    $region24: #{tpu_custom_call.1} parent=1 // pred_region
      %539 = dma.done [#allocation4], 1024
    $region25: #{tpu_custom_call.1} parent=1 // pred_fallthru
      _
    %540 = vsyncpa [#allocation3], 1
    %541 = vsyncpa [#allocation4], 1

</llo_original>
